<compile_context>
chip_gen: v6e
topology: v6e:2x2x1
jax: 0.10.0
libtpu: 0.0.40
codegen_flags: <defaults>
</compile_context>

<pallas_src>
import functools

import jax
import jax.numpy as jnp
from jax.experimental import pallas as pl
from jax.experimental.pallas import tpu as pltpu

HIDDEN = 128
LN_EPS = 1e-5
LANE = 128


def _round_up(n, m):
    return ((n + m - 1) // m) * m


def _mlp_encoder_kernel(x_ref, w1_ref, b1_ref, w2_ref, b2_ref,
                        w3_ref, b3_ref, g_ref, beta_ref, o_ref,
                        *, latent_dim, dot_dtype):
    # Whole hot path (3 matmuls, ReLUs, LayerNorm) for one batch tile.
    x = x_ref[...].astype(dot_dtype)

    h1 = jnp.dot(x, w1_ref[...], preferred_element_type=jnp.float32)
    h1 = jnp.maximum(h1 + b1_ref[...], 0.0)

    h2 = jnp.dot(h1.astype(dot_dtype), w2_ref[...],
                 preferred_element_type=jnp.float32)
    h2 = jnp.maximum(h2 + b2_ref[...], 0.0)

    h3 = jnp.dot(h2.astype(dot_dtype), w3_ref[...],
                 preferred_element_type=jnp.float32)
    h3 = h3 + b3_ref[...]

    # LayerNorm over the *true* latent_dim.  Invariant: padded lanes of h3 are
    # exactly zero because w3 and b3 are zero-padded in the wrapper, so the
    # sums need no lane mask.  One-pass variance (E[x^2] - mean^2) avoids the
    # extra "center then square" VPU passes; clamp guards f32 cancellation.
    inv_n = jnp.float32(1.0 / latent_dim)
    mean = jnp.sum(h3, axis=-1, keepdims=True) * inv_n
    sum_sq = jnp.sum(h3 * h3, axis=-1, keepdims=True)
    var = jnp.maximum(sum_sq * inv_n - mean * mean, 0.0)
    y = (h3 - mean) * jax.lax.rsqrt(var + LN_EPS)
    y = y * g_ref[...] + beta_ref[...]

    # Store only the true latent lanes: the HBM output is un-padded, the
    # 128-lane padding exists only for in-VMEM compute.
    o_ref[...] = y[:, :latent_dim].astype(o_ref.dtype)


def _vmem_limit_bytes(block_b, obs_dim, lp, latent_dim,
                      x_itemsize, w_itemsize, out_itemsize):
    # VMEM lays the minor dim out in 128-lane rows; budget with that padding.
    obs_l = _round_up(obs_dim, LANE)
    lat_l = _round_up(latent_dim, LANE)
    x_buf = 2 * block_b * obs_l * x_itemsize             # double-buffered x tile
    out_buf = 2 * block_b * lat_l * out_itemsize         # double-buffered out tile
    w_buf = 2 * (obs_l * HIDDEN + HIDDEN * HIDDEN + HIDDEN * lp) * w_itemsize
    vec_buf = 2 * (2 * HIDDEN + 3 * lp) * 4              # biases / gamma / beta
    inter = 4 * block_b * max(HIDDEN, lp) * 4            # h1/h2/h3 + temporaries
    est = x_buf + out_buf + w_buf + vec_buf + inter
    # ~2x headroom + fixed margin; 56 MiB ceiling is safe on every generation
    # (v7x has 64 MiB physical VMEM).
    return int(min(56 * 2**20, 2 * est + 8 * 2**20))


@functools.partial(jax.jit, static_argnames=("block_b", "use_bf16"))
def mlp_encoder_forward(x, params, *, block_b=1024, use_bf16=True):
    """Runs the MlpEncoder forward pass with a Pallas TPU kernel.

    x: (B, obs_dim), f32 (or bf16 — it is consumed as-is, no wrapper cast)
    params: dict of weights (see init_params), stored as (in, out)
    block_b: batch tile size (multiple of 8; sweep 512/1024/2048 at large B)
    use_bf16: feed the MXU bf16 operands (f32 accumulation / elementwise math)
    """
    B, obs_dim = x.shape
    latent_dim = params["w3"].shape[1]
    lp = _round_up(latent_dim, LANE)          # lane-padded latent width (compute only)
    pad_l = lp - latent_dim

    out_dtype = x.dtype
    dot_dtype = jnp.bfloat16 if use_bf16 else jnp.float32

    # ---- batch tiling ------------------------------------------------------
    # Tile is a multiple of 8 sublanes.  Prefer a tile that divides B exactly
    # (skips the jnp.pad pass over x and the [:B] output slice); when the grid
    # would have a single step, halve the tile so v7x's two TensorCores both
    # get work via the "parallel" batch axis.
    block_b = _round_up(max(8, min(int(block_b), _round_up(B, 8))), 8)
    if B % block_b != 0:
        for cand in range(block_b, 7, -8):
            if B % cand == 0:
                if cand * 4 >= block_b:       # don't shrink below block_b / 4
                    block_b = cand
                break
    b_pad = _round_up(B, block_b)
    if b_pad // block_b < 2 and block_b >= 16:
        half = _round_up(block_b // 2, 8)
        if half < block_b:
            block_b = half
            b_pad = _round_up(B, block_b)
    if b_pad != B:
        x = jnp.pad(x, ((0, b_pad - B), (0, 0)))

    # ---- weights (in, out) layout ------------------------------------------
    # MXU operands cast once here (tiny, VMEM-resident).  The last layer / LN
    # params are zero-padded so padded lanes of h3 are exactly zero (this is
    # the invariant the mask-free LayerNorm in the kernel relies on).
    w1 = params["w1"].astype(dot_dtype)
    w2 = params["w2"].astype(dot_dtype)
    w3 = jnp.pad(params["w3"], ((0, 0), (0, pad_l))).astype(dot_dtype)
    b1 = params["b1"].astype(jnp.float32)
    b2 = params["b2"].astype(jnp.float32)
    b3 = jnp.pad(params["b3"], ((0, 0), (0, pad_l))).astype(jnp.float32)
    gamma = jnp.pad(params["ln_gamma"], ((0, 0), (0, pad_l))).astype(jnp.float32)
    beta = jnp.pad(params["ln_beta"], ((0, 0), (0, pad_l))).astype(jnp.float32)

    grid = (b_pad // block_b,)

    kernel = functools.partial(
        _mlp_encoder_kernel, latent_dim=latent_dim, dot_dtype=dot_dtype)

    def param_spec(shape):
        # Constant block index -> DMA'd once, held resident across batch tiles.
        return pl.BlockSpec(shape, lambda i: (0,) * len(shape))

    vmem_limit = _vmem_limit_bytes(
        block_b, obs_dim, lp, latent_dim,
        x_itemsize=jnp.dtype(x.dtype).itemsize,
        w_itemsize=jnp.dtype(dot_dtype).itemsize,
        out_itemsize=jnp.dtype(out_dtype).itemsize)

    out = pl.pallas_call(
        kernel,
        # Un-padded output: only latent_dim lanes ever hit HBM.
        out_shape=jax.ShapeDtypeStruct((b_pad, latent_dim), out_dtype),
        grid_spec=pltpu.PrefetchScalarGridSpec(
            num_scalar_prefetch=0,
            grid=grid,
            in_specs=[
                pl.BlockSpec((block_b, obs_dim), lambda i: (i, 0)),   # x tile
                param_spec((obs_dim, HIDDEN)),                        # w1
                param_spec((1, HIDDEN)),                              # b1
                param_spec((HIDDEN, HIDDEN)),                         # w2
                param_spec((1, HIDDEN)),                              # b2
                param_spec((HIDDEN, lp)),                             # w3 (padded)
                param_spec((1, lp)),                                  # b3 (padded)
                param_spec((1, lp)),                                  # ln gamma
                param_spec((1, lp)),                                  # ln beta
            ],
            out_specs=pl.BlockSpec((block_b, latent_dim), lambda i: (i, 0)),
        ),
        compiler_params=pltpu.CompilerParams(
            dimension_semantics=("parallel",),
            vmem_limit_bytes=vmem_limit),
    )(x, w1, b1, w2, b2, w3, b3, gamma, beta)

    # Strip batch padding only when it was actually added.
    return out if b_pad == B else out[:B]


def init_params(key, obs_dim, latent_dim):
    """Parameter init mimicking torch Linear defaults
    (uniform(-1/sqrt(fan_in), 1/sqrt(fan_in))) and LayerNorm (gamma=1, beta=0)."""
    ks = jax.random.split(key, 6)

    def linear(kw, kb, fan_in, fan_out):
        bound = 1.0 / jnp.sqrt(fan_in)
        w = jax.random.uniform(kw, (fan_in, fan_out), jnp.float32, -bound, bound)
        b = jax.random.uniform(kb, (1, fan_out), jnp.float32, -bound, bound)
        return w, b

    w1, b1 = linear(ks[0], ks[1], obs_dim, HIDDEN)
    w2, b2 = linear(ks[2], ks[3], HIDDEN, HIDDEN)
    w3, b3 = linear(ks[4], ks[5], HIDDEN, latent_dim)
    return {
        "w1": w1, "b1": b1,
        "w2": w2, "b2": b2,
        "w3": w3, "b3": b3,
        "ln_gamma": jnp.ones((1, latent_dim), jnp.float32),
        "ln_beta": jnp.zeros((1, latent_dim), jnp.float32),
    }


def _reference_forward(x, params):
    """Pure-JAX f32 reference for correctness checking."""
    h = jnp.maximum(x @ params["w1"] + params["b1"], 0.0)
    h = jnp.maximum(h @ params["w2"] + params["b2"], 0.0)
    h = h @ params["w3"] + params["b3"]
    mean = jnp.mean(h, axis=-1, keepdims=True)
    var = jnp.mean((h - mean) ** 2, axis=-1, keepdims=True)
    return (h - mean) * jax.lax.rsqrt(var + LN_EPS) * params["ln_gamma"] + params["ln_beta"]


if __name__ == "__main__":
    key = jax.random.PRNGKey(0)
    k_x, k_p = jax.random.split(key)

    batch = 8
    obs_dim = 32
    latent_dim = 32

    x = jax.random.normal(k_x, (batch, obs_dim), jnp.float32)
    params = init_params(k_p, obs_dim, latent_dim)

    ref = _reference_forward(x, params)

    # Exact-semantics path (f32 matmuls) -- tight tolerance.
    out_f32 = jax.block_until_ready(
        mlp_encoder_forward(x, params, use_bf16=False))
    assert out_f32.shape == (batch, latent_dim)
    assert jnp.allclose(out_f32, ref, atol=1e-4, rtol=1e-4), "f32 path mismatch"

    # Fast path (bf16 MXU operands, f32 accumulation) -- bf16-level tolerance.
    out_bf16 = jax.block_until_ready(
        mlp_encoder_forward(x, params, use_bf16=True))
    assert out_bf16.shape == (batch, latent_dim)
    assert jnp.allclose(out_bf16, ref, atol=3e-2, rtol=3e-2), "bf16 path mismatch"

    # Multi-tile grid path (exercises divisor-picking and >1 grid steps).
    x2 = jax.random.normal(k_x, (40, obs_dim), jnp.float32)
    ref2 = _reference_forward(x2, params)
    out2 = jax.block_until_ready(
        mlp_encoder_forward(x2, params, block_b=16, use_bf16=False))
    assert out2.shape == (40, latent_dim)
    assert jnp.allclose(out2, ref2, atol=1e-4, rtol=1e-4), "multi-tile mismatch"

    print("KERNEL_OK")
</pallas_src>

<mosaic_0001>
module attributes {stable_mosaic.version = 11 : i64} {
  func.func @_mlp_encoder_kernel(%arg0: i32, %arg1: memref<8x32xf32, #tpu.memory_space<vmem>>, %arg2: memref<32x128xf32, #tpu.memory_space<vmem>>, %arg3: memref<1x128xf32, #tpu.memory_space<vmem>>, %arg4: memref<128x128xf32, #tpu.memory_space<vmem>>, %arg5: memref<1x128xf32, #tpu.memory_space<vmem>>, %arg6: memref<128x128xf32, #tpu.memory_space<vmem>>, %arg7: memref<1x128xf32, #tpu.memory_space<vmem>>, %arg8: memref<1x128xf32, #tpu.memory_space<vmem>>, %arg9: memref<1x128xf32, #tpu.memory_space<vmem>>, %arg10: memref<8x32xf32, #tpu.memory_space<vmem>>) attributes {dimension_semantics = [#tpu.dimension_semantics<parallel>], iteration_bounds = array<i64: 1>, scalar_prefetch = 0 : i64, scratch_operands = 0 : i64, tpu.core_type = #tpu.core_type<tc>, window_params = [{transform_indices = @transform_0, window_bounds = array<i64: 8, 32>}, {pipeline_mode = #tpu.pipeline_mode<synchronous>, transform_indices = @transform_1, window_bounds = array<i64: 32, 128>}, {pipeline_mode = #tpu.pipeline_mode<synchronous>, transform_indices = @transform_2, window_bounds = array<i64: 1, 128>}, {pipeline_mode = #tpu.pipeline_mode<synchronous>, transform_indices = @transform_3, window_bounds = array<i64: 128, 128>}, {pipeline_mode = #tpu.pipeline_mode<synchronous>, transform_indices = @transform_4, window_bounds = array<i64: 1, 128>}, {pipeline_mode = #tpu.pipeline_mode<synchronous>, transform_indices = @transform_5, window_bounds = array<i64: 128, 128>}, {pipeline_mode = #tpu.pipeline_mode<synchronous>, transform_indices = @transform_6, window_bounds = array<i64: 1, 128>}, {pipeline_mode = #tpu.pipeline_mode<synchronous>, transform_indices = @transform_7, window_bounds = array<i64: 1, 128>}, {pipeline_mode = #tpu.pipeline_mode<synchronous>, transform_indices = @transform_8, window_bounds = array<i64: 1, 128>}, {transform_indices = @transform_9, window_bounds = array<i64: 8, 32>}]} {
    %c0 = arith.constant 0 : index
    %c0_0 = arith.constant 0 : index
    %0 = vector.load %arg1[%c0, %c0_0] : memref<8x32xf32, #tpu.memory_space<vmem>>, vector<8x32xf32>
    %c0_1 = arith.constant 0 : index
    %c0_2 = arith.constant 0 : index
    %1 = vector.load %arg2[%c0_1, %c0_2] : memref<32x128xf32, #tpu.memory_space<vmem>>, vector<32x128xf32>
    %cst = arith.constant dense<0.000000e+00> : vector<8x128xf32>
    %2 = tpu.matmul %0, %1, %cst {dimension_numbers = #tpu.dot_dimension_numbers<[1], [0], [0], [1], [0, 0, 1, 1], [], []>} : vector<8x32xf32>, vector<32x128xf32>, vector<8x128xf32> -> vector<8x128xf32>
    %c0_3 = arith.constant 0 : index
    %c0_4 = arith.constant 0 : index
    %3 = vector.load %arg3[%c0_3, %c0_4] : memref<1x128xf32, #tpu.memory_space<vmem>>, vector<1x128xf32>
    %4 = vector.broadcast %3 : vector<1x128xf32> to vector<8x128xf32>
    %5 = arith.addf %2, %4 : vector<8x128xf32>
    %cst_5 = arith.constant 0.000000e+00 : f32
    %6 = vector.broadcast %cst_5 : f32 to vector<8x128xf32>
    %7 = arith.maximumf %5, %6 : vector<8x128xf32>
    %c0_6 = arith.constant 0 : index
    %c0_7 = arith.constant 0 : index
    %8 = vector.load %arg4[%c0_6, %c0_7] : memref<128x128xf32, #tpu.memory_space<vmem>>, vector<128x128xf32>
    %cst_8 = arith.constant dense<0.000000e+00> : vector<8x128xf32>
    %9 = tpu.matmul %7, %8, %cst_8 {dimension_numbers = #tpu.dot_dimension_numbers<[1], [0], [0], [1], [0, 0, 1, 1], [], []>} : vector<8x128xf32>, vector<128x128xf32>, vector<8x128xf32> -> vector<8x128xf32>
    %c0_9 = arith.constant 0 : index
    %c0_10 = arith.constant 0 : index
    %10 = vector.load %arg5[%c0_9, %c0_10] : memref<1x128xf32, #tpu.memory_space<vmem>>, vector<1x128xf32>
    %11 = vector.broadcast %10 : vector<1x128xf32> to vector<8x128xf32>
    %12 = arith.addf %9, %11 : vector<8x128xf32>
    %cst_11 = arith.constant 0.000000e+00 : f32
    %13 = vector.broadcast %cst_11 : f32 to vector<8x128xf32>
    %14 = arith.maximumf %12, %13 : vector<8x128xf32>
    %c0_12 = arith.constant 0 : index
    %c0_13 = arith.constant 0 : index
    %15 = vector.load %arg6[%c0_12, %c0_13] : memref<128x128xf32, #tpu.memory_space<vmem>>, vector<128x128xf32>
    %cst_14 = arith.constant dense<0.000000e+00> : vector<8x128xf32>
    %16 = tpu.matmul %14, %15, %cst_14 {dimension_numbers = #tpu.dot_dimension_numbers<[1], [0], [0], [1], [0, 0, 1, 1], [], []>} : vector<8x128xf32>, vector<128x128xf32>, vector<8x128xf32> -> vector<8x128xf32>
    %c0_15 = arith.constant 0 : index
    %c0_16 = arith.constant 0 : index
    %17 = vector.load %arg7[%c0_15, %c0_16] : memref<1x128xf32, #tpu.memory_space<vmem>>, vector<1x128xf32>
    %18 = vector.broadcast %17 : vector<1x128xf32> to vector<8x128xf32>
    %19 = arith.addf %16, %18 : vector<8x128xf32>
    %cst_17 = arith.constant dense<0.000000e+00> : vector<8xf32>
    %20 = vector.multi_reduction <add>, %19, %cst_17 [1] : vector<8x128xf32> to vector<8xf32>
    %21 = vector.shape_cast %20 : vector<8xf32> to vector<8x1xf32>
    %cst_18 = arith.constant 3.125000e-02 : f32
    %22 = vector.broadcast %cst_18 : f32 to vector<8x1xf32>
    %23 = arith.mulf %21, %22 : vector<8x1xf32>
    %24 = arith.mulf %19, %19 : vector<8x128xf32>
    %cst_19 = arith.constant dense<0.000000e+00> : vector<8xf32>
    %25 = vector.multi_reduction <add>, %24, %cst_19 [1] : vector<8x128xf32> to vector<8xf32>
    %26 = vector.shape_cast %25 : vector<8xf32> to vector<8x1xf32>
    %cst_20 = arith.constant 3.125000e-02 : f32
    %27 = vector.broadcast %cst_20 : f32 to vector<8x1xf32>
    %28 = arith.mulf %26, %27 : vector<8x1xf32>
    %29 = arith.mulf %23, %23 : vector<8x1xf32>
    %30 = arith.subf %28, %29 : vector<8x1xf32>
    %cst_21 = arith.constant 0.000000e+00 : f32
    %31 = vector.broadcast %cst_21 : f32 to vector<8x1xf32>
    %32 = arith.maximumf %30, %31 : vector<8x1xf32>
    %33 = vector.broadcast %23 : vector<8x1xf32> to vector<8x128xf32>
    %34 = arith.subf %19, %33 : vector<8x128xf32>
    %cst_22 = arith.constant 9.99999974E-6 : f32
    %35 = vector.broadcast %cst_22 : f32 to vector<8x1xf32>
    %36 = arith.addf %32, %35 : vector<8x1xf32>
    %37 = math.rsqrt %36 : vector<8x1xf32>
    %38 = vector.broadcast %37 : vector<8x1xf32> to vector<8x128xf32>
    %39 = arith.mulf %34, %38 : vector<8x128xf32>
    %c0_23 = arith.constant 0 : index
    %c0_24 = arith.constant 0 : index
    %40 = vector.load %arg8[%c0_23, %c0_24] : memref<1x128xf32, #tpu.memory_space<vmem>>, vector<1x128xf32>
    %41 = vector.broadcast %40 : vector<1x128xf32> to vector<8x128xf32>
    %42 = arith.mulf %39, %41 : vector<8x128xf32>
    %c0_25 = arith.constant 0 : index
    %c0_26 = arith.constant 0 : index
    %43 = vector.load %arg9[%c0_25, %c0_26] : memref<1x128xf32, #tpu.memory_space<vmem>>, vector<1x128xf32>
    %44 = vector.broadcast %43 : vector<1x128xf32> to vector<8x128xf32>
    %45 = arith.addf %42, %44 : vector<8x128xf32>
    %46 = vector.extract_strided_slice %45 {offsets = [0, 0], sizes = [8, 32], strides = [1, 1]} : vector<8x128xf32> to vector<8x32xf32>
    %c0_27 = arith.constant 0 : index
    %c0_28 = arith.constant 0 : index
    %47 = vector.load %arg10[%c0_27, %c0_28] : memref<8x32xf32, #tpu.memory_space<vmem>>, vector<8x32xf32>
    tpu.vector_store %arg10[%c0_27, %c0_28], %46 {strides = array<i32>} : memref<8x32xf32, #tpu.memory_space<vmem>>, vector<8x32xf32>,
    return
  }
  func.func @transform_0(%arg0: i32) -> (i32, i32) {
    %c0_i32 = arith.constant 0 : i32
    %c0_i32_0 = arith.constant 0 : i32
    return %arg0, %c0_i32 : i32, i32
  }
  func.func @transform_1(%arg0: i32) -> (i32, i32) {
    %c0_i32 = arith.constant 0 : i32
    %c0_i32_0 = arith.constant 0 : i32
    %c0_i32_1 = arith.constant 0 : i32
    return %c0_i32, %c0_i32_0 : i32, i32
  }
  func.func @transform_2(%arg0: i32) -> (i32, i32) {
    %c0_i32 = arith.constant 0 : i32
    %c0_i32_0 = arith.constant 0 : i32
    %c0_i32_1 = arith.constant 0 : i32
    return %c0_i32, %c0_i32_0 : i32, i32
  }
  func.func @transform_3(%arg0: i32) -> (i32, i32) {
    %c0_i32 = arith.constant 0 : i32
    %c0_i32_0 = arith.constant 0 : i32
    %c0_i32_1 = arith.constant 0 : i32
    return %c0_i32, %c0_i32_0 : i32, i32
  }
  func.func @transform_4(%arg0: i32) -> (i32, i32) {
    %c0_i32 = arith.constant 0 : i32
    %c0_i32_0 = arith.constant 0 : i32
    %c0_i32_1 = arith.constant 0 : i32
    return %c0_i32, %c0_i32_0 : i32, i32
  }
  func.func @transform_5(%arg0: i32) -> (i32, i32) {
    %c0_i32 = arith.constant 0 : i32
    %c0_i32_0 = arith.constant 0 : i32
    %c0_i32_1 = arith.constant 0 : i32
    return %c0_i32, %c0_i32_0 : i32, i32
  }
  func.func @transform_6(%arg0: i32) -> (i32, i32) {
    %c0_i32 = arith.constant 0 : i32
    %c0_i32_0 = arith.constant 0 : i32
    %c0_i32_1 = arith.constant 0 : i32
    return %c0_i32, %c0_i32_0 : i32, i32
  }
  func.func @transform_7(%arg0: i32) -> (i32, i32) {
    %c0_i32 = arith.constant 0 : i32
    %c0_i32_0 = arith.constant 0 : i32
    %c0_i32_1 = arith.constant 0 : i32
    return %c0_i32, %c0_i32_0 : i32, i32
  }
  func.func @transform_8(%arg0: i32) -> (i32, i32) {
    %c0_i32 = arith.constant 0 : i32
    %c0_i32_0 = arith.constant 0 : i32
    %c0_i32_1 = arith.constant 0 : i32
    return %c0_i32, %c0_i32_0 : i32, i32
  }
  func.func @transform_9(%arg0: i32) -> (i32, i32) {
    %c0_i32 = arith.constant 0 : i32
    %c0_i32_0 = arith.constant 0 : i32
    return %arg0, %c0_i32 : i32, i32
  }
}

</mosaic_0001>

<llo_original>
// kernel: mlp_encoder_forward.1
$region0: #{mlp_encoder_forward.1}
  #allocation0 [shape = 'u32[]', space=smem, size = 0x4, offset = 0x4, fixed_abs, tag = 'smem constant byte address 0x4 - core index']
  #allocation1 [shape = 'u32[144,128]{1,0:T(1,128)}', space=vmem, size = 0x12000, scoped, tag = 'internal scratch']
  %s0 = inlined_call_operand.vmem [shape: f32[8,32], index: 0, kind: input, shape index: {}]
  %s1 = inlined_call_operand.vmem [shape: f32[32,128], index: 1, kind: input, shape index: {}]
  %s2 = inlined_call_operand.vmem [shape: f32[1,128], index: 2, kind: input, shape index: {}]
  %s3 = inlined_call_operand.vmem [shape: f32[128,128], index: 3, kind: input, shape index: {}]
  %s4 = inlined_call_operand.vmem [shape: f32[1,128], index: 4, kind: input, shape index: {}]
  %s5 = inlined_call_operand.vmem [shape: f32[128,128], index: 5, kind: input, shape index: {}]
  %s6 = inlined_call_operand.vmem [shape: f32[1,128], index: 6, kind: input, shape index: {}]
  %s7 = inlined_call_operand.vmem [shape: f32[1,128], index: 7, kind: input, shape index: {}]
  %s8 = inlined_call_operand.vmem [shape: f32[1,128], index: 8, kind: input, shape index: {}]
  %s9 = inlined_call_operand.hbm [shape: f32[8,32], index: 9, kind: output, shape index: {}]
  %s10 = sld [smem:[#allocation0]]
  $region46: #{mlp_encoder_forward.1} parent=0
    _
  %s12 = ssub.s32 1, %s10
  %s13 = scalar_select 0, %s12, %s10
  $region1: #{mlp_encoder_forward.1} parent=0
    #allocation2 [shape = 'u8[4096]{0}', space=vmem, size = 0x1000, scoped, tag = 'output window, operand 0, single buffered']
    #allocation3 [shape = 's32[1]{0}', space=sflag, size = 0x4, scoped, tag = 'scoped memory for mlp_encoder_forward.1']
    %14 = vsyncpa [#allocation3], 0
    // Predicated region
    $region2: #{mlp_encoder_forward.1} parent=1 // pred_check
      _
    $region3: #{mlp_encoder_forward.1} parent=1 // pred_check_branch
      %16 = sbr.rel (0) target = $region5
    $region4: #{mlp_encoder_forward.1} parent=1 // pred_region
      _
    $region5: #{mlp_encoder_forward.1} parent=1 // pred_fallthru
      _
    // Predicated region
    $region6: #{mlp_encoder_forward.1} parent=1 // pred_check
      _
    $region7: #{mlp_encoder_forward.1} parent=1 // pred_check_branch
      %18 = sbr.rel (0) target = $region9
    $region8: #{mlp_encoder_forward.1} parent=1 // pred_region
      _
    $region9: #{mlp_encoder_forward.1} parent=1 // pred_fallthru
      _
    // Predicated region
    $region10: #{mlp_encoder_forward.1} parent=1 // pred_check
      _
    $region11: #{mlp_encoder_forward.1} parent=1 // pred_check_branch
      %20 = sbr.rel (0) target = $region13
    $region12: #{mlp_encoder_forward.1} parent=1 // pred_region
      _
    $region13: #{mlp_encoder_forward.1} parent=1 // pred_fallthru
      _
    // Predicated region
    $region14: #{mlp_encoder_forward.1} parent=1 // pred_check
      _
    $region15: #{mlp_encoder_forward.1} parent=1 // pred_check_branch
      %22 = sbr.rel (0) target = $region17
    $region16: #{mlp_encoder_forward.1} parent=1 // pred_region
      _
    $region17: #{mlp_encoder_forward.1} parent=1 // pred_fallthru
      _
    // Predicated region
    $region18: #{mlp_encoder_forward.1} parent=1 // pred_check
      _
    $region19: #{mlp_encoder_forward.1} parent=1 // pred_check_branch
      %24 = sbr.rel (0) target = $region21
    $region20: #{mlp_encoder_forward.1} parent=1 // pred_region
      _
    $region21: #{mlp_encoder_forward.1} parent=1 // pred_fallthru
      _
    // Predicated region
    $region22: #{mlp_encoder_forward.1} parent=1 // pred_check
      _
    $region23: #{mlp_encoder_forward.1} parent=1 // pred_check_branch
      %26 = sbr.rel (0) target = $region25
    $region24: #{mlp_encoder_forward.1} parent=1 // pred_region
      _
    $region25: #{mlp_encoder_forward.1} parent=1 // pred_fallthru
      _
    // Predicated region
    $region26: #{mlp_encoder_forward.1} parent=1 // pred_check
      _
    $region27: #{mlp_encoder_forward.1} parent=1 // pred_check_branch
      %28 = sbr.rel (0) target = $region29
    $region28: #{mlp_encoder_forward.1} parent=1 // pred_region
      _
    $region29: #{mlp_encoder_forward.1} parent=1 // pred_fallthru
      _
    // Predicated region
    $region30: #{mlp_encoder_forward.1} parent=1 // pred_check
      _
    $region31: #{mlp_encoder_forward.1} parent=1 // pred_check_branch
      %30 = sbr.rel (0) target = $region33
    $region32: #{mlp_encoder_forward.1} parent=1 // pred_region
      _
    $region33: #{mlp_encoder_forward.1} parent=1 // pred_fallthru
      _
    // Predicated region
    $region34: #{mlp_encoder_forward.1} parent=1 // pred_check
      _
    $region35: #{mlp_encoder_forward.1} parent=1 // pred_check_branch
      %32 = sbr.rel (0) target = $region37
    $region36: #{mlp_encoder_forward.1} parent=1 // pred_region
      _
    $region37: #{mlp_encoder_forward.1} parent=1 // pred_fallthru
      _
    %v33 = vld [vmem:[%s0] sm:$0xff]
    %v34 = vld [vmem:[%s1] sm:$0xff]
    %v35 = vld [vmem:[%s1 + $0x8] sm:$0xff]
    %v36 = vld [vmem:[%s1 + $0x10] sm:$0xff]
    %v37 = vld [vmem:[%s1 + $0x18] sm:$0xff]
    %v38 = vld [vmem:[%s2] sm:$0x1]
    %v40 = vlaneseq
    %v41 = vshrl.u32 %v40, 7
    %v42 = vsub.s32 0, %v41
    %v43 = vrot.slane %v38, %v42
    %vm45 = vcmask 261120
    %v47 = vsel %vm45, %v33, 0
    %49 = vmatprep.subr.mxu0 0.0
    %50 = vmatpush1.msra.mxu0 0.0
    %51 = vmatprep.subr.mxu0 0.0
    %52 = vmatpush1.msra.mxu0 0.0
    %53 = vmatprep.subr.mxu0 0.0
    %54 = vmatpush1.msra.mxu0 0.0
    %55 = vmatprep.subr.mxu0 0.0
    %56 = vmatpush1.msra.mxu0 0.0
    %57 = vmatprep.subr.mxu0 0.0
    %58 = vmatpush1.msra.mxu0 0.0
    %59 = vmatprep.subr.mxu0 0.0
    %60 = vmatpush1.msra.mxu0 0.0
    %61 = vmatprep.subr.mxu0 0.0
    %62 = vmatpush1.msra.mxu0 0.0
    %63 = vmatprep.subr.mxu0 0.0
    %64 = vmatpush1.msra.mxu0 0.0
    %65 = vmatprep.subr.mxu0 0.0
    %66 = vmatpush1.msra.mxu0 0.0
    %67 = vmatprep.subr.mxu0 0.0
    %68 = vmatpush1.msra.mxu0 0.0
    %69 = vmatprep.subr.mxu0 0.0
    %70 = vmatpush1.msra.mxu0 0.0
    %71 = vmatprep.subr.mxu0 0.0
    %72 = vmatpush1.msra.mxu0 0.0
    %73 = vmatprep.subr.mxu0 0.0
    %74 = vmatpush1.msra.mxu0 %v37
    %75 = vmatprep.subr.mxu0 0.0
    %76 = vmatpush1.msra.mxu0 %v36
    %77 = vmatprep.subr.mxu0 0.0
    %78 = vmatpush1.msra.mxu0 %v35
    %79 = vmatprep.subr.mxu0 0.0
    %80 = vmatpush1.msra.mxu0 %v34
    %81 = vmatprep.subr.mxu0 0.0
    %82 = vmatpush2.msra.mxu0 0.0
    %83 = vmatprep.subr.mxu0 0.0
    %84 = vmatpush2.msra.mxu0 0.0
    %85 = vmatprep.subr.mxu0 0.0
    %86 = vmatpush2.msra.mxu0 0.0
    %87 = vmatprep.subr.mxu0 0.0
    %88 = vmatpush2.msra.mxu0 0.0
    %89 = vmatprep.subr.mxu0 0.0
    %90 = vmatpush2.msra.mxu0 0.0
    %91 = vmatprep.subr.mxu0 0.0
    %92 = vmatpush2.msra.mxu0 0.0
    %93 = vmatprep.subr.mxu0 0.0
    %94 = vmatpush2.msra.mxu0 0.0
    %95 = vmatprep.subr.mxu0 0.0
    %96 = vmatpush2.msra.mxu0 0.0
    %97 = vmatprep.subr.mxu0 0.0
    %98 = vmatpush2.msra.mxu0 0.0
    %99 = vmatprep.subr.mxu0 0.0
    %100 = vmatpush2.msra.mxu0 0.0
    %101 = vmatprep.subr.mxu0 0.0
    %102 = vmatpush2.msra.mxu0 0.0
    %103 = vmatprep.subr.mxu0 0.0
    %104 = vmatpush2.msra.mxu0 0.0
    %105 = vmatprep.subr.mxu0 0.0
    %106 = vmatpush2.msra.mxu0 0.0
    %107 = vmatprep.subr.mxu0 0.0
    %108 = vmatpush2.msra.mxu0 0.0
    %109 = vmatprep.subr.mxu0 0.0
    %110 = vmatpush2.msra.mxu0 0.0
    %111 = vmatprep.subr.mxu0 0.0
    %112 = vmatpush2.msra.mxu0 0.0
    %113 = vmatprep.mubr.f32.mxu0 0.0
    %114 = vmatmul.mubr.f32.gmra.mxu0 %v47
    %v115 = vpop.f32.mrf.mxu0
    %v116 = vadd.f32 %v43, %v115
    %v117 = vpop.f32.mrf.mxu0
    %118 = vdwg.mxu0
    %v119 = vmax.f32 %v116, 0.0
    %v120 = vld [vmem:[%s3] sm:$0xff]
    %v121 = vld [vmem:[%s3 + $0x8] sm:$0xff]
    %v122 = vld [vmem:[%s3 + $0x10] sm:$0xff]
    %v123 = vld [vmem:[%s3 + $0x18] sm:$0xff]
    %v124 = vld [vmem:[%s3 + $0x20] sm:$0xff]
    %v125 = vld [vmem:[%s3 + $0x28] sm:$0xff]
    %v126 = vld [vmem:[%s3 + $0x30] sm:$0xff]
    %v127 = vld [vmem:[%s3 + $0x38] sm:$0xff]
    %v128 = vld [vmem:[%s3 + $0x40] sm:$0xff]
    %v129 = vld [vmem:[%s3 + $0x48] sm:$0xff]
    %v130 = vld [vmem:[%s3 + $0x50] sm:$0xff]
    %v131 = vld [vmem:[%s3 + $0x58] sm:$0xff]
    %v132 = vld [vmem:[%s3 + $0x60] sm:$0xff]
    %v133 = vld [vmem:[%s3 + $0x68] sm:$0xff]
    %v134 = vld [vmem:[%s3 + $0x70] sm:$0xff]
    %v135 = vld [vmem:[%s3 + $0x78] sm:$0xff]
    %v136 = vld [vmem:[%s4] sm:$0x1]
    %v138 = vlaneseq
    %v139 = vshrl.u32 %v138, 7
    %v140 = vsub.s32 0, %v139
    %v141 = vrot.slane %v136, %v140
    %143 = vmatprep.subr.mxu0 0.0
    %144 = vmatpush1.msra.mxu0 %v135
    %145 = vmatprep.subr.mxu0 0.0
    %146 = vmatpush1.msra.mxu0 %v134
    %147 = vmatprep.subr.mxu0 0.0
    %148 = vmatpush1.msra.mxu0 %v133
    %149 = vmatprep.subr.mxu0 0.0
    %150 = vmatpush1.msra.mxu0 %v132
    %151 = vmatprep.subr.mxu0 0.0
    %152 = vmatpush1.msra.mxu0 %v131
    %153 = vmatprep.subr.mxu0 0.0
    %154 = vmatpush1.msra.mxu0 %v130
    %155 = vmatprep.subr.mxu0 0.0
    %156 = vmatpush1.msra.mxu0 %v129
    %157 = vmatprep.subr.mxu0 0.0
    %158 = vmatpush1.msra.mxu0 %v128
    %159 = vmatprep.subr.mxu0 0.0
    %160 = vmatpush1.msra.mxu0 %v127
    %161 = vmatprep.subr.mxu0 0.0
    %162 = vmatpush1.msra.mxu0 %v126
    %163 = vmatprep.subr.mxu0 0.0
    %164 = vmatpush1.msra.mxu0 %v125
    %165 = vmatprep.subr.mxu0 0.0
    %166 = vmatpush1.msra.mxu0 %v124
    %167 = vmatprep.subr.mxu0 0.0
    %168 = vmatpush1.msra.mxu0 %v123
    %169 = vmatprep.subr.mxu0 0.0
    %170 = vmatpush1.msra.mxu0 %v122
    %171 = vmatprep.subr.mxu0 0.0
    %172 = vmatpush1.msra.mxu0 %v121
    %173 = vmatprep.subr.mxu0 0.0
    %174 = vmatpush1.msra.mxu0 %v120
    %175 = vmatprep.subr.mxu0 0.0
    %176 = vmatpush2.msra.mxu0 0.0
    %177 = vmatprep.subr.mxu0 0.0
    %178 = vmatpush2.msra.mxu0 0.0
    %179 = vmatprep.subr.mxu0 0.0
    %180 = vmatpush2.msra.mxu0 0.0
    %181 = vmatprep.subr.mxu0 0.0
    %182 = vmatpush2.msra.mxu0 0.0
    %183 = vmatprep.subr.mxu0 0.0
    %184 = vmatpush2.msra.mxu0 0.0
    %185 = vmatprep.subr.mxu0 0.0
    %186 = vmatpush2.msra.mxu0 0.0
    %187 = vmatprep.subr.mxu0 0.0
    %188 = vmatpush2.msra.mxu0 0.0
    %189 = vmatprep.subr.mxu0 0.0
    %190 = vmatpush2.msra.mxu0 0.0
    %191 = vmatprep.subr.mxu0 0.0
    %192 = vmatpush2.msra.mxu0 0.0
    %193 = vmatprep.subr.mxu0 0.0
    %194 = vmatpush2.msra.mxu0 0.0
    %195 = vmatprep.subr.mxu0 0.0
    %196 = vmatpush2.msra.mxu0 0.0
    %197 = vmatprep.subr.mxu0 0.0
    %198 = vmatpush2.msra.mxu0 0.0
    %199 = vmatprep.subr.mxu0 0.0
    %200 = vmatpush2.msra.mxu0 0.0
    %201 = vmatprep.subr.mxu0 0.0
    %202 = vmatpush2.msra.mxu0 0.0
    %203 = vmatprep.subr.mxu0 0.0
    %204 = vmatpush2.msra.mxu0 0.0
    %205 = vmatprep.subr.mxu0 0.0
    %206 = vmatpush2.msra.mxu0 0.0
    %207 = vmatprep.mubr.f32.mxu0 0.0
    %208 = vmatmul.mubr.f32.gmra.mxu0 %v119
    %v209 = vpop.f32.mrf.mxu0
    %v210 = vadd.f32 %v141, %v209
    %v211 = vpop.f32.mrf.mxu0
    %212 = vdwg.mxu0
    %v213 = vmax.f32 %v210, 0.0
    %v214 = vld [vmem:[%s5] sm:$0xff]
    %v215 = vld [vmem:[%s5 + $0x8] sm:$0xff]
    %v216 = vld [vmem:[%s5 + $0x10] sm:$0xff]
    %v217 = vld [vmem:[%s5 + $0x18] sm:$0xff]
    %v218 = vld [vmem:[%s5 + $0x20] sm:$0xff]
    %v219 = vld [vmem:[%s5 + $0x28] sm:$0xff]
    %v220 = vld [vmem:[%s5 + $0x30] sm:$0xff]
    %v221 = vld [vmem:[%s5 + $0x38] sm:$0xff]
    %v222 = vld [vmem:[%s5 + $0x40] sm:$0xff]
    %v223 = vld [vmem:[%s5 + $0x48] sm:$0xff]
    %v224 = vld [vmem:[%s5 + $0x50] sm:$0xff]
    %v225 = vld [vmem:[%s5 + $0x58] sm:$0xff]
    %v226 = vld [vmem:[%s5 + $0x60] sm:$0xff]
    %v227 = vld [vmem:[%s5 + $0x68] sm:$0xff]
    %v228 = vld [vmem:[%s5 + $0x70] sm:$0xff]
    %v229 = vld [vmem:[%s5 + $0x78] sm:$0xff]
    %v230 = vld [vmem:[%s6] sm:$0x1]
    %v232 = vlaneseq
    %v233 = vshrl.u32 %v232, 7
    %v234 = vsub.s32 0, %v233
    %v235 = vrot.slane %v230, %v234
    %237 = vmatprep.subr.mxu0 0.0
    %238 = vmatpush1.msra.mxu0 %v229
    %239 = vmatprep.subr.mxu0 0.0
    %240 = vmatpush1.msra.mxu0 %v228
    %241 = vmatprep.subr.mxu0 0.0
    %242 = vmatpush1.msra.mxu0 %v227
    %243 = vmatprep.subr.mxu0 0.0
    %244 = vmatpush1.msra.mxu0 %v226
    %245 = vmatprep.subr.mxu0 0.0
    %246 = vmatpush1.msra.mxu0 %v225
    %247 = vmatprep.subr.mxu0 0.0
    %248 = vmatpush1.msra.mxu0 %v224
    %249 = vmatprep.subr.mxu0 0.0
    %250 = vmatpush1.msra.mxu0 %v223
    %251 = vmatprep.subr.mxu0 0.0
    %252 = vmatpush1.msra.mxu0 %v222
    %253 = vmatprep.subr.mxu0 0.0
    %254 = vmatpush1.msra.mxu0 %v221
    %255 = vmatprep.subr.mxu0 0.0
    %256 = vmatpush1.msra.mxu0 %v220
    %257 = vmatprep.subr.mxu0 0.0
    %258 = vmatpush1.msra.mxu0 %v219
    %259 = vmatprep.subr.mxu0 0.0
    %260 = vmatpush1.msra.mxu0 %v218
    %261 = vmatprep.subr.mxu0 0.0
    %262 = vmatpush1.msra.mxu0 %v217
    %263 = vmatprep.subr.mxu0 0.0
    %264 = vmatpush1.msra.mxu0 %v216
    %265 = vmatprep.subr.mxu0 0.0
    %266 = vmatpush1.msra.mxu0 %v215
    %267 = vmatprep.subr.mxu0 0.0
    %268 = vmatpush1.msra.mxu0 %v214
    %269 = vmatprep.subr.mxu0 0.0
    %270 = vmatpush2.msra.mxu0 0.0
    %271 = vmatprep.subr.mxu0 0.0
    %272 = vmatpush2.msra.mxu0 0.0
    %273 = vmatprep.subr.mxu0 0.0
    %274 = vmatpush2.msra.mxu0 0.0
    %275 = vmatprep.subr.mxu0 0.0
    %276 = vmatpush2.msra.mxu0 0.0
    %277 = vmatprep.subr.mxu0 0.0
    %278 = vmatpush2.msra.mxu0 0.0
    %279 = vmatprep.subr.mxu0 0.0
    %280 = vmatpush2.msra.mxu0 0.0
    %281 = vmatprep.subr.mxu0 0.0
    %282 = vmatpush2.msra.mxu0 0.0
    %283 = vmatprep.subr.mxu0 0.0
    %284 = vmatpush2.msra.mxu0 0.0
    %285 = vmatprep.subr.mxu0 0.0
    %286 = vmatpush2.msra.mxu0 0.0
    %287 = vmatprep.subr.mxu0 0.0
    %288 = vmatpush2.msra.mxu0 0.0
    %289 = vmatprep.subr.mxu0 0.0
    %290 = vmatpush2.msra.mxu0 0.0
    %291 = vmatprep.subr.mxu0 0.0
    %292 = vmatpush2.msra.mxu0 0.0
    %293 = vmatprep.subr.mxu0 0.0
    %294 = vmatpush2.msra.mxu0 0.0
    %295 = vmatprep.subr.mxu0 0.0
    %296 = vmatpush2.msra.mxu0 0.0
    %297 = vmatprep.subr.mxu0 0.0
    %298 = vmatpush2.msra.mxu0 0.0
    %299 = vmatprep.subr.mxu0 0.0
    %300 = vmatpush2.msra.mxu0 0.0
    %301 = vmatprep.mubr.f32.mxu0 0.0
    %302 = vmatmul.mubr.f32.gmra.mxu0 %v213
    %v303 = vpop.f32.mrf.mxu0
    %v304 = vadd.f32 %v235, %v303
    %v305 = vpop.f32.mrf.mxu0
    %306 = vdwg.mxu0
    %307 = vadd.xlane.f32.xlu0 %v304
    %v308 = vpop.xlane.xlu0 %307
    %v309 = vmul.f32 %v308, 0.03125
    %v310 = vmul.f32 %v304, %v304
    %311 = vadd.xlane.f32.xlu0 %v310
    %v312 = vpop.xlane.xlu0 %311
    %v313 = vmul.f32 %v312, 0.03125
    %v314 = vmul.f32 %v309, %v309
    %v315 = vsub.f32 %v313, %v314
    %v316 = vmax.f32 %v315, 0.0
    %v317 = vsub.f32 %v304, %v309
    %v318 = vadd.f32 %v316, 1e-05
    %v319 = vrsqrt.pop %v318
    %v320 = vmul.f32 %v317, %v319
    %v321 = vld [vmem:[%s7] sm:$0x1]
    %v323 = vlaneseq
    %v324 = vshrl.u32 %v323, 7
    %v325 = vsub.s32 0, %v324
    %v326 = vrot.slane %v321, %v325
    %v328 = vmul.f32 %v320, %v326
    %v329 = vld [vmem:[%s8] sm:$0x1]
    %v331 = vlaneseq
    %v332 = vshrl.u32 %v331, 7
    %v333 = vsub.s32 0, %v332
    %v334 = vrot.slane %v329, %v333
    %v336 = vadd.f32 %v328, %v334
    %337 = vst.msk [vmem:[#allocation2] sm:$0xff] %vm45, %v336
    // Predicated region
    $region38: #{mlp_encoder_forward.1} parent=1 // pred_check
      _
    $region39: #{mlp_encoder_forward.1} parent=1 // pred_check_branch
      %339 = sbr.rel (0) target = $region41
    $region40: #{mlp_encoder_forward.1} parent=1 // pred_region
      %s341 = ssub.s32 128, 128
      %342 = vsyncadd [#allocation3], %s341
      %s344 = sshll.u32 [#allocation2], 4
      %s345 = int_to_ptr.vmem [resolvable:$true] %s344
      %347 = dma.vmem_to_hbm [thread:$0]  %s345, 128, %s9, [#allocation3]
    $region41: #{mlp_encoder_forward.1} parent=1 // pred_fallthru
      _
    // Predicated region
    $region42: #{mlp_encoder_forward.1} parent=1 // pred_check
      _
    $region43: #{mlp_encoder_forward.1} parent=1 // pred_check_branch
      %349 = sbr.rel (0) target = $region45
    $region44: #{mlp_encoder_forward.1} parent=1 // pred_region
      %350 = dma.done [#allocation3], 128
    $region45: #{mlp_encoder_forward.1} parent=1 // pred_fallthru
      _
    %351 = vsyncpa [#allocation3], 1

</llo_original>
